<compile_context>
chip_gen: v6e
topology: v6e:2x2x1
jax: 0.10.0
libtpu: 0.0.40
codegen_flags: <defaults>
</compile_context>

<pallas_src>
import functools

import jax
import jax.numpy as jnp
import numpy as np
from jax.experimental import pallas as pl
from jax.experimental.pallas import tpu as pltpu


def _lj_kernel(pos_nd_ref, pos_dn_ref, energy_ref, forces_ref, *,
               sigma, epsilon, cutoff):
    """Per-system LJ pair kernel.

    pos_nd_ref: (N_pad_j, 3)   positions, atom-major (padding rows at 1e6)
    pos_dn_ref: (3, N_pad_j)   positions, coordinate-major
    energy_ref: (1, 1)         0.5 * sum of pair energies
    forces_ref: (N_pad_i, 3)   per-atom forces (N_pad_i = multiple of 8 >= n)
    """
    n_i = forces_ref.shape[0]

    # r_i as columns (N_pad_i, 1), r_j as rows (1, N_pad_j).
    pos_i = pos_nd_ref[0:n_i, :]                   # (N_pad_i, 3)
    xi = pos_i[:, 0:1]
    yi = pos_i[:, 1:2]
    zi = pos_i[:, 2:3]
    xj = pos_dn_ref[0:1, :]
    yj = pos_dn_ref[1:2, :]
    zj = pos_dn_ref[2:3, :]

    # dr_vec[i, j] = r_i - r_j  (displacement from j to i); only r^2 is kept.
    dx = xi - xj
    dy = yi - yj
    dz = zi - zj
    r2 = dx * dx + dy * dy + dz * dz               # (N_pad_i, N_pad_j)

    # Diagonal / coincident pairs have r2 == 0 (matches the reference's
    # torch.where(dr > 0, ..., 0)); padding<->padding pairs also have r2 == 0,
    # padding<->real pairs are far beyond the cutoff. So no extra mask needed.
    cutoff_sq = cutoff * cutoff
    pair_ok = (r2 > 0.0) & (r2 < cutoff_sq)

    # One exact divide; everything else is multiplies.
    inv_r2 = 1.0 / jnp.where(pair_ok, r2, 1.0)
    idr2 = (sigma * sigma) * inv_r2
    idr6 = idr2 * idr2 * idr2
    idr12 = idr6 * idr6

    # V(r) = 4*eps*[(sigma/r)^12 - (sigma/r)^6]
    pair_e = jnp.where(pair_ok, (4.0 * epsilon) * (idr12 - idr6), 0.0)
    energy_ref[...] = 0.5 * jnp.sum(pair_e, keepdims=True)

    # F(r)/r = 24*eps/r^2 * [2*(sigma/r)^12 - (sigma/r)^6]; zero where masked.
    fscale = jnp.where(pair_ok,
                       (24.0 * epsilon) * inv_r2 * (2.0 * idr12 - idr6), 0.0)

    # F_i = sum_j fscale[i,j]*(r_i - r_j)
    #     = rowsum(fscale)_i * r_i - (fscale @ pos)_i     (MXU matmul)
    rowsum = jnp.sum(fscale, axis=1, keepdims=True)        # (N_pad_i, 1)
    forces_ref[...] = rowsum * pos_i - jnp.dot(
        fscale, pos_nd_ref[...], preferred_element_type=jnp.float32)


def lennard_jones_forward(positions, *, sigma=1.0, epsilon=1.0, cutoff=None):
    """positions: [n_systems, n_atoms, 3] float32.

    Returns {"energy": [n_systems], "forces": [n_systems * n_atoms, 3]},
    matching LennardJonesModel.forward's batched output convention.
    """
    if cutoff is None:
        cutoff = 2.5 * sigma
    positions = jnp.asarray(positions, jnp.float32)
    s, n, _ = positions.shape

    # Asymmetric padding: i-axis (sublane) to 8, j-axis (lane) to 128.
    n_pad_i = ((n + 7) // 8) * 8
    n_pad_j = ((n + 127) // 128) * 128
    pad_j = n_pad_j - n

    # Padding atoms are parked far away (excluded via cutoff / r2>0 guards).
    pos_pad = jnp.pad(positions, ((0, 0), (0, pad_j), (0, 0)),
                      constant_values=1e6)
    pos_nd = pos_pad                                 # [S, N_pad_j, 3]
    pos_dn = jnp.transpose(pos_pad, (0, 2, 1))       # [S, 3, N_pad_j]

    kernel = functools.partial(_lj_kernel, sigma=float(sigma),
                               epsilon=float(epsilon), cutoff=float(cutoff))

    energy, forces = pl.pallas_call(
        kernel,
        out_shape=(jax.ShapeDtypeStruct((s, 1, 1), jnp.float32),
                   jax.ShapeDtypeStruct((s, n_pad_i, 3), jnp.float32)),
        grid=(s,),
        in_specs=[
            pl.BlockSpec((None, n_pad_j, 3), lambda i: (i, 0, 0)),
            pl.BlockSpec((None, 3, n_pad_j), lambda i: (i, 0, 0)),
        ],
        out_specs=(
            pl.BlockSpec((None, 1, 1), lambda i: (i, 0, 0)),
            pl.BlockSpec((None, n_pad_i, 3), lambda i: (i, 0, 0)),
        ),
        compiler_params=pltpu.CompilerParams(
            dimension_semantics=("parallel",),
            vmem_limit_bytes=32 * 1024 * 1024),
    )(pos_nd, pos_dn)

    return {
        "energy": energy.reshape(s),
        "forces": forces[:, :n, :].reshape(s * n, 3),
    }


def _ref_forward(positions, sigma, epsilon, cutoff):
    """Pure-JAX reference mirroring the torch full-pairwise path."""
    def one(pos):
        dr_vec = pos[:, None, :] - pos[None, :, :]
        dist = jnp.sqrt(jnp.sum(dr_vec * dr_vec, axis=-1))
        eye = jnp.eye(pos.shape[0], dtype=bool)
        dist = jnp.where(eye, jnp.inf, dist)
        within = dist < cutoff
        idr = sigma / dist
        idr6 = idr ** 6
        idr12 = idr6 * idr6
        e = 4.0 * epsilon * (idr12 - idr6)
        e = jnp.where((dist > 0) & within, e, 0.0)
        energy = 0.5 * jnp.sum(e)
        f = 24.0 * epsilon / dist * (2.0 * idr12 - idr6)
        f = jnp.where((dist > 0) & within, f, 0.0)
        fv = (f / jnp.where(dist > 0, dist, 1.0))[..., None] * dr_vec
        forces = jnp.sum(fv, axis=1)
        return energy, forces

    es, fs = jax.vmap(one)(positions)
    return es, fs.reshape(-1, 3)


if __name__ == "__main__":
    key = jax.random.PRNGKey(0)
    n_systems, n_atoms = 2, 32

    # 4x4x2 lattice (spacing 1.1) + small jitter -> moderate LJ energies/forces.
    gx, gy, gz = jnp.meshgrid(jnp.arange(4.0), jnp.arange(4.0), jnp.arange(2.0),
                              indexing="ij")
    lattice = 1.1 * jnp.stack([gx.ravel(), gy.ravel(), gz.ravel()], axis=-1)
    jitter = 0.05 * jax.random.uniform(key, (n_systems, n_atoms, 3),
                                       minval=-1.0, maxval=1.0)
    positions = (lattice[None] + jitter).astype(jnp.float32)

    out = lennard_jones_forward(positions, sigma=1.0, epsilon=1.0, cutoff=2.5)
    jax.block_until_ready(out["energy"])
    jax.block_until_ready(out["forces"])

    e_ref, f_ref = _ref_forward(positions, 1.0, 1.0, 2.5)
    np.testing.assert_allclose(np.asarray(out["energy"]), np.asarray(e_ref),
                               rtol=1e-4, atol=1e-4)
    np.testing.assert_allclose(np.asarray(out["forces"]), np.asarray(f_ref),
                               rtol=1e-4, atol=1e-3)

    # TODO(synk): neighbor-list path (vesin_nl_ts), PBC shifts, stress /
    # per-atom decompositions are not implemented (defaults don't use them).
    # TODO(synk): for very large n_atoms, add a j-tile grid axis with VMEM
    # accumulators; for many tiny systems, pack several per 128-lane tile.
    print("KERNEL_OK")
</pallas_src>

<mosaic_0001>
module attributes {stable_mosaic.version = 11 : i64} {
  func.func @_lj_kernel(%arg0: i32, %arg1: memref<1x128x3xf32, #tpu.memory_space<vmem>>, %arg2: memref<1x3x128xf32, #tpu.memory_space<vmem>>, %arg3: memref<1x1x1xf32, #tpu.memory_space<vmem>>, %arg4: memref<1x32x3xf32, #tpu.memory_space<vmem>>) attributes {dimension_semantics = [#tpu.dimension_semantics<parallel>], iteration_bounds = array<i64: 2>, scalar_prefetch = 0 : i64, scratch_operands = 0 : i64, tpu.core_type = #tpu.core_type<tc>, window_params = [{transform_indices = @transform_0, window_bounds = array<i64: 1, 128, 3>}, {transform_indices = @transform_1, window_bounds = array<i64: 1, 3, 128>}, {transform_indices = @transform_2, window_bounds = array<i64: 1, 1, 1>}, {transform_indices = @transform_3, window_bounds = array<i64: 1, 32, 3>}]} {
    %c0 = arith.constant 0 : index
    %c0_0 = arith.constant 0 : index
    %c0_1 = arith.constant 0 : index
    %0 = vector.load %arg1[%c0, %c0_0, %c0_1] : memref<1x128x3xf32, #tpu.memory_space<vmem>>, vector<1x32x3xf32>
    %1 = vector.shape_cast %0 : vector<1x32x3xf32> to vector<32x3xf32>
    %2 = vector.extract_strided_slice %1 {offsets = [0, 0], sizes = [32, 1], strides = [1, 1]} : vector<32x3xf32> to vector<32x1xf32>
    %3 = vector.extract_strided_slice %1 {offsets = [0, 1], sizes = [32, 1], strides = [1, 1]} : vector<32x3xf32> to vector<32x1xf32>
    %4 = vector.extract_strided_slice %1 {offsets = [0, 2], sizes = [32, 1], strides = [1, 1]} : vector<32x3xf32> to vector<32x1xf32>
    %c0_2 = arith.constant 0 : index
    %c0_3 = arith.constant 0 : index
    %c0_4 = arith.constant 0 : index
    %5 = vector.load %arg2[%c0_2, %c0_3, %c0_4] : memref<1x3x128xf32, #tpu.memory_space<vmem>>, vector<1x1x128xf32>
    %6 = vector.shape_cast %5 : vector<1x1x128xf32> to vector<1x128xf32>
    %c0_5 = arith.constant 0 : index
    %c1 = arith.constant 1 : index
    %c0_6 = arith.constant 0 : index
    %7 = vector.load %arg2[%c0_5, %c1, %c0_6] : memref<1x3x128xf32, #tpu.memory_space<vmem>>, vector<1x1x128xf32>
    %8 = vector.shape_cast %7 : vector<1x1x128xf32> to vector<1x128xf32>
    %c0_7 = arith.constant 0 : index
    %c2 = arith.constant 2 : index
    %c0_8 = arith.constant 0 : index
    %9 = vector.load %arg2[%c0_7, %c2, %c0_8] : memref<1x3x128xf32, #tpu.memory_space<vmem>>, vector<1x1x128xf32>
    %10 = vector.shape_cast %9 : vector<1x1x128xf32> to vector<1x128xf32>
    %11 = vector.broadcast %2 : vector<32x1xf32> to vector<32x128xf32>
    %12 = vector.broadcast %6 : vector<1x128xf32> to vector<32x128xf32>
    %13 = arith.subf %11, %12 : vector<32x128xf32>
    %14 = vector.broadcast %3 : vector<32x1xf32> to vector<32x128xf32>
    %15 = vector.broadcast %8 : vector<1x128xf32> to vector<32x128xf32>
    %16 = arith.subf %14, %15 : vector<32x128xf32>
    %17 = vector.broadcast %4 : vector<32x1xf32> to vector<32x128xf32>
    %18 = vector.broadcast %10 : vector<1x128xf32> to vector<32x128xf32>
    %19 = arith.subf %17, %18 : vector<32x128xf32>
    %20 = arith.mulf %13, %13 : vector<32x128xf32>
    %21 = arith.mulf %16, %16 : vector<32x128xf32>
    %22 = arith.addf %20, %21 : vector<32x128xf32>
    %23 = arith.mulf %19, %19 : vector<32x128xf32>
    %24 = arith.addf %22, %23 : vector<32x128xf32>
    %cst = arith.constant 0.000000e+00 : f32
    %25 = vector.broadcast %cst : f32 to vector<32x128xf32>
    %26 = arith.cmpf ogt, %24, %25 : vector<32x128xf32>
    %cst_9 = arith.constant 6.250000e+00 : f32
    %27 = vector.broadcast %cst_9 : f32 to vector<32x128xf32>
    %28 = arith.cmpf olt, %24, %27 : vector<32x128xf32>
    %29 = arith.andi %26, %28 : vector<32x128xi1>
    %cst_10 = arith.constant 1.000000e+00 : f32
    %30 = vector.broadcast %cst_10 : f32 to vector<32x128xf32>
    %31 = arith.select %29, %24, %30 : vector<32x128xi1>, vector<32x128xf32>
    %cst_11 = arith.constant 1.000000e+00 : f32
    %32 = vector.broadcast %cst_11 : f32 to vector<32x128xf32>
    %33 = arith.divf %32, %31 : vector<32x128xf32>
    %cst_12 = arith.constant 1.000000e+00 : f32
    %34 = vector.broadcast %cst_12 : f32 to vector<32x128xf32>
    %35 = arith.mulf %34, %33 : vector<32x128xf32>
    %36 = arith.mulf %35, %35 : vector<32x128xf32>
    %37 = arith.mulf %36, %35 : vector<32x128xf32>
    %38 = arith.mulf %37, %37 : vector<32x128xf32>
    %39 = arith.subf %38, %37 : vector<32x128xf32>
    %cst_13 = arith.constant 4.000000e+00 : f32
    %40 = vector.broadcast %cst_13 : f32 to vector<32x128xf32>
    %41 = arith.mulf %40, %39 : vector<32x128xf32>
    %cst_14 = arith.constant 0.000000e+00 : f32
    %42 = vector.broadcast %cst_14 : f32 to vector<32x128xf32>
    %43 = arith.select %29, %41, %42 : vector<32x128xi1>, vector<32x128xf32>
    %44 = vector.shape_cast %43 : vector<32x128xf32> to vector<1x32x128xf32>
    %cst_15 = arith.constant dense<0.000000e+00> : vector<1xf32>
    %45 = vector.multi_reduction <add>, %44, %cst_15 [1, 2] : vector<1x32x128xf32> to vector<1xf32>
    %46 = vector.shape_cast %45 : vector<1xf32> to vector<1x1x1xf32>
    %47 = vector.extract %46[0, 0, 0] : f32 from vector<1x1x1xf32>
    %48 = vector.broadcast %47 : f32 to vector<1x1xf32>
    %cst_16 = arith.constant 5.000000e-01 : f32
    %49 = vector.broadcast %cst_16 : f32 to vector<1x1xf32>
    %50 = arith.mulf %49, %48 : vector<1x1xf32>
    %c0_17 = arith.constant 0 : index
    %c0_18 = arith.constant 0 : index
    %c0_19 = arith.constant 0 : index
    %51 = vector.load %arg3[%c0_17, %c0_18, %c0_19] : memref<1x1x1xf32, #tpu.memory_space<vmem>>, vector<1x1x1xf32>
    %52 = vector.shape_cast %51 : vector<1x1x1xf32> to vector<1x1xf32>
    %53 = vector.shape_cast %50 : vector<1x1xf32> to vector<1x1x1xf32>
    tpu.vector_store %arg3[%c0_17, %c0_18, %c0_19], %53 {strides = array<i32>} : memref<1x1x1xf32, #tpu.memory_space<vmem>>, vector<1x1x1xf32>,
    %cst_20 = arith.constant 2.400000e+01 : f32
    %54 = vector.broadcast %cst_20 : f32 to vector<32x128xf32>
    %55 = arith.mulf %54, %33 : vector<32x128xf32>
    %cst_21 = arith.constant 2.000000e+00 : f32
    %56 = vector.broadcast %cst_21 : f32 to vector<32x128xf32>
    %57 = arith.mulf %56, %38 : vector<32x128xf32>
    %58 = arith.subf %57, %37 : vector<32x128xf32>
    %59 = arith.mulf %55, %58 : vector<32x128xf32>
    %cst_22 = arith.constant 0.000000e+00 : f32
    %60 = vector.broadcast %cst_22 : f32 to vector<32x128xf32>
    %61 = arith.select %29, %59, %60 : vector<32x128xi1>, vector<32x128xf32>
    %cst_23 = arith.constant dense<0.000000e+00> : vector<32xf32>
    %62 = vector.multi_reduction <add>, %61, %cst_23 [1] : vector<32x128xf32> to vector<32xf32>
    %63 = vector.shape_cast %62 : vector<32xf32> to vector<32x1xf32>
    %64 = vector.broadcast %63 : vector<32x1xf32> to vector<32x3xf32>
    %65 = arith.mulf %64, %1 : vector<32x3xf32>
    %c0_24 = arith.constant 0 : index
    %c0_25 = arith.constant 0 : index
    %c0_26 = arith.constant 0 : index
    %66 = vector.load %arg1[%c0_24, %c0_25, %c0_26] : memref<1x128x3xf32, #tpu.memory_space<vmem>>, vector<1x128x3xf32>
    %67 = vector.shape_cast %66 : vector<1x128x3xf32> to vector<128x3xf32>
    %cst_27 = arith.constant dense<0.000000e+00> : vector<32x3xf32>
    %68 = tpu.matmul %61, %67, %cst_27 {dimension_numbers = #tpu.dot_dimension_numbers<[1], [0], [0], [1], [0, 0, 1, 1], [], []>} : vector<32x128xf32>, vector<128x3xf32>, vector<32x3xf32> -> vector<32x3xf32>
    %69 = arith.subf %65, %68 : vector<32x3xf32>
    %c0_28 = arith.constant 0 : index
    %c0_29 = arith.constant 0 : index
    %c0_30 = arith.constant 0 : index
    %70 = vector.load %arg4[%c0_28, %c0_29, %c0_30] : memref<1x32x3xf32, #tpu.memory_space<vmem>>, vector<1x32x3xf32>
    %71 = vector.shape_cast %70 : vector<1x32x3xf32> to vector<32x3xf32>
    %72 = vector.shape_cast %69 : vector<32x3xf32> to vector<1x32x3xf32>
    tpu.vector_store %arg4[%c0_28, %c0_29, %c0_30], %72 {strides = array<i32>} : memref<1x32x3xf32, #tpu.memory_space<vmem>>, vector<1x32x3xf32>,
    return
  }
  func.func @transform_0(%arg0: i32) -> (i32, i32, i32) {
    %c0_i32 = arith.constant 0 : i32
    %c0_i32_0 = arith.constant 0 : i32
    %c0_i32_1 = arith.constant 0 : i32
    return %arg0, %c0_i32, %c0_i32_0 : i32, i32, i32
  }
  func.func @transform_1(%arg0: i32) -> (i32, i32, i32) {
    %c0_i32 = arith.constant 0 : i32
    %c0_i32_0 = arith.constant 0 : i32
    %c0_i32_1 = arith.constant 0 : i32
    return %arg0, %c0_i32, %c0_i32_0 : i32, i32, i32
  }
  func.func @transform_2(%arg0: i32) -> (i32, i32, i32) {
    %c0_i32 = arith.constant 0 : i32
    %c0_i32_0 = arith.constant 0 : i32
    %c0_i32_1 = arith.constant 0 : i32
    return %arg0, %c0_i32, %c0_i32_0 : i32, i32, i32
  }
  func.func @transform_3(%arg0: i32) -> (i32, i32, i32) {
    %c0_i32 = arith.constant 0 : i32
    %c0_i32_0 = arith.constant 0 : i32
    %c0_i32_1 = arith.constant 0 : i32
    return %arg0, %c0_i32, %c0_i32_0 : i32, i32, i32
  }
}

</mosaic_0001>

<llo_original>
// kernel: tpu_custom_call.1
$region0: #{tpu_custom_call.1}
  #allocation0 [shape = 'u32[]', space=smem, size = 0x4, offset = 0x4, fixed_abs, tag = 'smem constant byte address 0x4 - core index']
  #allocation1 [shape = 'u32[144,128]{1,0:T(1,128)}', space=vmem, size = 0x12000, scoped, tag = 'internal scratch']
  %s0 = inlined_call_operand.vmem [shape: f32[2,128,3], index: 0, kind: input, shape index: {}]
  %s1 = inlined_call_operand.vmem [shape: f32[2,3,128], index: 1, kind: input, shape index: {}]
  %s2 = inlined_call_operand.vmem [shape: f32[2,1,1], index: 2, kind: output, shape index: {0}]
  %s3 = inlined_call_operand.vmem [shape: f32[2,32,3], index: 3, kind: output, shape index: {1}]
  %4 = xla_tuple %s2, %s3
  %s5 = sld [smem:[#allocation0]]
  $region49: #{tpu_custom_call.1} parent=0
    _
  %s7 = ssub.s32 1, %s5
  %s8 = scalar_select 0, %s7, %s5
  loop: start=0, step=1, limit=4
  $region2: #{tpu_custom_call.1} parent=0 // loop_pre_header
    _
  $region3: #{tpu_custom_call.1} parent=0 // loop_header
    %s10 = sphi 0, %s14
    %p11 = scmp.ge.s32.totalorder %s10, 4
    %s20 = sphi 0, %s22
    %s23 = sphi 0, %s20
    %s24 = sphi 0, %s23
    %s40 = sphi 0, %s24
    %s46 = sphi 0, %s48
    %s49 = sphi 0, %s46
    %s50 = sphi 0, %s49
    %s66 = sphi 0, %s50
    %s72 = sphi 0, %s74
    %s75 = sphi 0, %s72
    %s76 = sphi 0, %s75
    %s92 = sphi 0, %s76
    %s98 = sphi 0, %s100
    %s101 = sphi 0, %s98
    %s102 = sphi 0, %s101
    %s118 = sphi 0, %s102
  $region4: #{tpu_custom_call.1} parent=0 // loop_header_branch
    %13 = sbr.rel (%p11) target = $region8
  $region5: #{tpu_custom_call.1} parent=0 // loop_body
    %s15 = ssub.s32 %s10, 1
    %s16 = ssub.s32 %s10, 2
    %s17 = sadd.s32 %s10, 1
    %s18 = ssub.s32 %s10, %s17
    %p19 = scmp.eq.s32.totalorder %s18, 0
    %s21 = sadd.s32 %s20, 1
    %s22 = scalar_select %p19, %s20, %s21
    %p25 = pneg %p19
    %p26 = scmp.eq.s32.totalorder %s10, 1
    %p27 = por %p25, %p26
    %p28 = scmp.ne.s32.totalorder %s20, %s23
    %p29 = scmp.eq.s32.totalorder %s10, 0
    %p30 = por %p28, %p29
    %p31 = scmp.ne.s32.totalorder %s20, %s23
    %p32 = scmp.eq.s32.totalorder %s15, 1
    %p33 = por %p31, %p32
    %p34 = scmp.ne.s32.totalorder %s23, %s24
    %p35 = scmp.eq.s32.totalorder %s15, 0
    %p36 = por %p34, %p35
    %p37 = scmp.ne.s32.totalorder %s23, %s24
    %p38 = scmp.eq.s32.totalorder %s16, 1
    %p39 = por %p37, %p38
    %p41 = scmp.ne.s32.totalorder %s24, %s40
    %p42 = scmp.eq.s32.totalorder %s16, 0
    %p43 = por %p41, %p42
    %s44 = ssub.s32 %s10, %s17
    %p45 = scmp.eq.s32.totalorder %s44, 0
    %s47 = sadd.s32 %s46, 1
    %s48 = scalar_select %p45, %s46, %s47
    %p51 = pneg %p45
    %p52 = scmp.eq.s32.totalorder %s10, 1
    %p53 = por %p51, %p52
    %p54 = scmp.ne.s32.totalorder %s46, %s49
    %p55 = scmp.eq.s32.totalorder %s10, 0
    %p56 = por %p54, %p55
    %p57 = scmp.ne.s32.totalorder %s46, %s49
    %p58 = scmp.eq.s32.totalorder %s15, 1
    %p59 = por %p57, %p58
    %p60 = scmp.ne.s32.totalorder %s49, %s50
    %p61 = scmp.eq.s32.totalorder %s15, 0
    %p62 = por %p60, %p61
    %p63 = scmp.ne.s32.totalorder %s49, %s50
    %p64 = scmp.eq.s32.totalorder %s16, 1
    %p65 = por %p63, %p64
    %p67 = scmp.ne.s32.totalorder %s50, %s66
    %p68 = scmp.eq.s32.totalorder %s16, 0
    %p69 = por %p67, %p68
    %s70 = ssub.s32 %s10, %s17
    %p71 = scmp.eq.s32.totalorder %s70, 0
    %s73 = sadd.s32 %s72, 1
    %s74 = scalar_select %p71, %s72, %s73
    %p77 = pneg %p71
    %p78 = scmp.eq.s32.totalorder %s10, 1
    %p79 = por %p77, %p78
    %p80 = scmp.ne.s32.totalorder %s72, %s75
    %p81 = scmp.eq.s32.totalorder %s10, 0
    %p82 = por %p80, %p81
    %p83 = scmp.ne.s32.totalorder %s72, %s75
    %p84 = scmp.eq.s32.totalorder %s15, 1
    %p85 = por %p83, %p84
    %p86 = scmp.ne.s32.totalorder %s75, %s76
    %p87 = scmp.eq.s32.totalorder %s15, 0
    %p88 = por %p86, %p87
    %p89 = scmp.ne.s32.totalorder %s75, %s76
    %p90 = scmp.eq.s32.totalorder %s16, 1
    %p91 = por %p89, %p90
    %p93 = scmp.ne.s32.totalorder %s76, %s92
    %p94 = scmp.eq.s32.totalorder %s16, 0
    %p95 = por %p93, %p94
    %s96 = ssub.s32 %s10, %s17
    %p97 = scmp.eq.s32.totalorder %s96, 0
    %s99 = sadd.s32 %s98, 1
    %s100 = scalar_select %p97, %s98, %s99
    %p103 = pneg %p97
    %p104 = scmp.eq.s32.totalorder %s10, 1
    %p105 = por %p103, %p104
    %p106 = scmp.ne.s32.totalorder %s98, %s101
    %p107 = scmp.eq.s32.totalorder %s10, 0
    %p108 = por %p106, %p107
    %p109 = scmp.ne.s32.totalorder %s98, %s101
    %p110 = scmp.eq.s32.totalorder %s15, 1
    %p111 = por %p109, %p110
    %p112 = scmp.ne.s32.totalorder %s101, %s102
    %p113 = scmp.eq.s32.totalorder %s15, 0
    %p114 = por %p112, %p113
    %p115 = scmp.ne.s32.totalorder %s101, %s102
    %p116 = scmp.eq.s32.totalorder %s16, 1
    %p117 = por %p115, %p116
    %p119 = scmp.ne.s32.totalorder %s102, %s118
    %p120 = scmp.eq.s32.totalorder %s16, 0
    %p121 = por %p119, %p120
    %p122 = scmp.le.s32.totalorder 1, %s10
    %p123 = scmp.lt.s32.totalorder %s10, 3
    %p124 = pnand %p122, %p123
    %p125 = pneg %p124
    // Predicated region
    $region9: #{tpu_custom_call.1} parent=5 // pred_check
      _
    $region10: #{tpu_custom_call.1} parent=5 // pred_check_branch
      %127 = sbr.rel (%p124) target = $region12
    $region11: #{tpu_custom_call.1} parent=5 // pred_region
      %s128 = ssub.s32 %s10, 1
    $region12: #{tpu_custom_call.1} parent=5 // pred_fallthru
      _
    %p129 = scmp.lt.s32.totalorder %s10, 2
    // Predicated region
    $region13: #{tpu_custom_call.1} parent=5 // pred_check
      %p130 = pneg %p129
    $region14: #{tpu_custom_call.1} parent=5 // pred_check_branch
      %132 = sbr.rel (%p130) target = $region16
    $region15: #{tpu_custom_call.1} parent=5 // pred_region
      // Predicated region
      $region17: #{tpu_custom_call.1} parent=15 // pred_check
        %p133 = pneg %p30
      $region18: #{tpu_custom_call.1} parent=15 // pred_check_branch
        %135 = sbr.rel (%p133) target = $region20
      $region19: #{tpu_custom_call.1} parent=15 // pred_region
        %p136 = scmp.lt.s32.totalorder %s10, 1
        %s137 = scalar_select %p136, %s10, 1
        %s138 = smul.addr %s137, 16
        %s139 = smul.addr %s138, 8
        %s140 = scalar_lea.vmem %s0, %s139
      $region20: #{tpu_custom_call.1} parent=15 // pred_fallthru
        _
      // Predicated region
      $region21: #{tpu_custom_call.1} parent=15 // pred_check
        %p141 = pneg %p56
      $region22: #{tpu_custom_call.1} parent=15 // pred_check_branch
        %143 = sbr.rel (%p141) target = $region24
      $region23: #{tpu_custom_call.1} parent=15 // pred_region
        %p144 = scmp.lt.s32.totalorder %s10, 1
        %s145 = scalar_select %p144, %s10, 1
        %s146 = smul.addr %s145, 4
        %s147 = scalar_lea.vmem %s1, %s146
      $region24: #{tpu_custom_call.1} parent=15 // pred_fallthru
        _
    $region16: #{tpu_custom_call.1} parent=5 // pred_fallthru
      _
    %p148 = scmp.le.s32.totalorder 1, %s10
    %p149 = scmp.lt.s32.totalorder %s10, 3
    %p150 = pnand %p148, %p149
    %p151 = pneg %p150
    // Predicated region
    $region25: #{tpu_custom_call.1} parent=5 // pred_check
      _
    $region26: #{tpu_custom_call.1} parent=5 // pred_check_branch
      %153 = sbr.rel (%p150) target = $region28
    $region27: #{tpu_custom_call.1} parent=5 // pred_region
      %s154 = ssub.s32 %s10, 1
      %p155 = scmp.lt.s32.totalorder %s15, 1
      %s156 = scalar_select %p155, %s15, 1
      %s157 = smul.addr %s156, 16
      %s158 = smul.addr %s157, 8
      %s159 = scalar_lea.vmem %s0, %s158
      %p160 = pneg %p36
      %p161 = pneg %p33
      %p162 = scmp.lt.s32.totalorder %s15, 1
      %s163 = scalar_select %p162, %s15, 1
      %s164 = smul.addr %s163, 4
      %s165 = scalar_lea.vmem %s1, %s164
      %p166 = pneg %p62
      %p167 = pneg %p59
      %p168 = pneg %p88
      %p169 = pneg %p85
      %p170 = scmp.lt.s32.totalorder %s15, 1
      %s171 = scalar_select %p170, %s15, 1
      %s172 = scalar_lea.vmem %s2, %s171
      %p173 = pneg %p114
      %p174 = pneg %p111
      %p175 = scmp.lt.s32.totalorder %s15, 1
      %s176 = scalar_select %p175, %s15, 1
      %s177 = smul.addr %s176, 4
      %s178 = smul.addr %s177, 8
      %s179 = scalar_lea.vmem %s3, %s178
      %p180 = scmp.lt.s32.totalorder %s15, 1
      %s181 = scalar_select %p180, %s15, 1
      %s182 = smul.addr %s181, 16
      %s183 = smul.addr %s182, 8
      %s184 = scalar_lea.vmem %s0, %s183
      %p185 = scmp.lt.s32.totalorder %s15, 1
      %s186 = scalar_select %p185, %s15, 1
      %s187 = smul.addr %s186, 4
      %s188 = scalar_lea.vmem %s1, %s187
      %p189 = scmp.lt.s32.totalorder %s15, 1
      %s190 = scalar_select %p189, %s15, 1
      %s191 = scalar_lea.vmem %s2, %s190
      %p192 = scmp.lt.s32.totalorder %s15, 1
      %s193 = scalar_select %p192, %s15, 1
      %s194 = smul.addr %s193, 4
      %s195 = smul.addr %s194, 8
      %s196 = scalar_lea.vmem %s3, %s195
      %v197 = vld [vmem:[%s184] sm:$0xff]
      %v198 = vld [vmem:[%s184 + $0x8] sm:$0xff]
      %v199 = vld [vmem:[%s184 + $0x10] sm:$0xff]
      %v200 = vld [vmem:[%s184 + $0x18] sm:$0xff]
      %v201 = vld [vmem:[%s188] sm:$0x1]
      %v202 = vld [vmem:[%s188 + $0x1] sm:$0x1]
      %v203 = vld [vmem:[%s188 + $0x2] sm:$0x1]
      %205 = vset.pattern.permute.xlu0 0
      %206 = vperm.xlu0 %205, %v197
      %v207 = vpop.permute.xlu0 %206
      %210 = vset.pattern.permute.xlu0 0
      %211 = vperm.xlu0 %210, %v198
      %v212 = vpop.permute.xlu0 %211
      %215 = vset.pattern.permute.xlu0 0
      %216 = vperm.xlu0 %215, %v199
      %v217 = vpop.permute.xlu0 %216
      %220 = vset.pattern.permute.xlu0 0
      %221 = vperm.xlu0 %220, %v200
      %v222 = vpop.permute.xlu0 %221
      %v224 = vlaneseq
      %v225 = vshrl.u32 %v224, 7
      %v226 = vsub.s32 0, %v225
      %v227 = vrot.slane %v201, %v226
      %v228 = vsub.f32 %v207, %v227
      %v229 = vsub.f32 %v212, %v227
      %v230 = vsub.f32 %v217, %v227
      %v231 = vsub.f32 %v222, %v227
      %232 = vset.pattern.permute.xlu0 1
      %233 = vperm.xlu0 %232, %v197
      %v234 = vpop.permute.xlu0 %233
      %236 = vset.pattern.permute.xlu0 1
      %237 = vperm.xlu0 %236, %v198
      %v238 = vpop.permute.xlu0 %237
      %240 = vset.pattern.permute.xlu0 1
      %241 = vperm.xlu0 %240, %v199
      %v242 = vpop.permute.xlu0 %241
      %244 = vset.pattern.permute.xlu0 1
      %245 = vperm.xlu0 %244, %v200
      %v246 = vpop.permute.xlu0 %245
      %v248 = vlaneseq
      %v249 = vshrl.u32 %v248, 7
      %v250 = vsub.s32 0, %v249
      %v251 = vrot.slane %v202, %v250
      %v252 = vsub.f32 %v234, %v251
      %v253 = vsub.f32 %v238, %v251
      %v254 = vsub.f32 %v242, %v251
      %v255 = vsub.f32 %v246, %v251
      %256 = vset.pattern.permute.xlu0 2
      %257 = vperm.xlu0 %256, %v197
      %v258 = vpop.permute.xlu0 %257
      %260 = vset.pattern.permute.xlu0 2
      %261 = vperm.xlu0 %260, %v198
      %v262 = vpop.permute.xlu0 %261
      %264 = vset.pattern.permute.xlu0 2
      %265 = vperm.xlu0 %264, %v199
      %v266 = vpop.permute.xlu0 %265
      %268 = vset.pattern.permute.xlu0 2
      %269 = vperm.xlu0 %268, %v200
      %v270 = vpop.permute.xlu0 %269
      %v272 = vlaneseq
      %v273 = vshrl.u32 %v272, 7
      %v274 = vsub.s32 0, %v273
      %v275 = vrot.slane %v203, %v274
      %v276 = vsub.f32 %v258, %v275
      %v277 = vsub.f32 %v262, %v275
      %v278 = vsub.f32 %v266, %v275
      %v279 = vsub.f32 %v270, %v275
      %v280 = vmul.f32 %v228, %v228
      %v281 = vmul.f32 %v229, %v229
      %v282 = vmul.f32 %v230, %v230
      %v283 = vmul.f32 %v231, %v231
      %v284 = vmul.f32 %v252, %v252
      %v285 = vmul.f32 %v253, %v253
      %v286 = vmul.f32 %v254, %v254
      %v287 = vmul.f32 %v255, %v255
      %v288 = vadd.f32 %v280, %v284
      %v289 = vadd.f32 %v281, %v285
      %v290 = vadd.f32 %v282, %v286
      %v291 = vadd.f32 %v283, %v287
      %v292 = vmul.f32 %v276, %v276
      %v293 = vmul.f32 %v277, %v277
      %v294 = vmul.f32 %v278, %v278
      %v295 = vmul.f32 %v279, %v279
      %v296 = vadd.f32 %v288, %v292
      %v297 = vadd.f32 %v289, %v293
      %v298 = vadd.f32 %v290, %v294
      %v299 = vadd.f32 %v291, %v295
      %vm300 = vcmp.gt.f32.partialorder %v296, 0.0
      %vm301 = vcmp.gt.f32.partialorder %v297, 0.0
      %vm302 = vcmp.gt.f32.partialorder %v298, 0.0
      %vm303 = vcmp.gt.f32.partialorder %v299, 0.0
      %vm304 = vcmp.lt.f32.partialorder %v296, 6.25
      %vm305 = vcmp.lt.f32.partialorder %v297, 6.25
      %vm306 = vcmp.lt.f32.partialorder %v298, 6.25
      %vm307 = vcmp.lt.f32.partialorder %v299, 6.25
      %vm308 = vmand %vm300, %vm304
      %vm309 = vmand %vm301, %vm305
      %vm310 = vmand %vm302, %vm306
      %vm311 = vmand %vm303, %vm307
      %v312 = vsel %vm308, %v296, 1.0
      %v313 = vsel %vm309, %v297, 1.0
      %v314 = vsel %vm310, %v298, 1.0
      %v315 = vsel %vm311, %v299, 1.0
      %v316 = vrcp.pop %v312
      %v317 = vmul.f32 1.0, %v316
      %v318 = vrcp.pop %v313
      %v319 = vmul.f32 1.0, %v318
      %v320 = vrcp.pop %v314
      %v321 = vmul.f32 1.0, %v320
      %v322 = vrcp.pop %v315
      %v323 = vmul.f32 1.0, %v322
      %v324 = vmul.f32 %v317, %v317
      %v325 = vmul.f32 %v319, %v319
      %v326 = vmul.f32 %v321, %v321
      %v327 = vmul.f32 %v323, %v323
      %v328 = vmul.f32 %v324, %v317
      %v329 = vmul.f32 %v325, %v319
      %v330 = vmul.f32 %v326, %v321
      %v331 = vmul.f32 %v327, %v323
      %v332 = vmul.f32 %v328, %v328
      %v333 = vmul.f32 %v329, %v329
      %v334 = vmul.f32 %v330, %v330
      %v335 = vmul.f32 %v331, %v331
      %v336 = vsub.f32 %v332, %v328
      %v337 = vsub.f32 %v333, %v329
      %v338 = vsub.f32 %v334, %v330
      %v339 = vsub.f32 %v335, %v331
      %v340 = vmul.f32 %v336, 4.0
      %v341 = vmul.f32 %v337, 4.0
      %v342 = vmul.f32 %v338, 4.0
      %v343 = vmul.f32 %v339, 4.0
      %v344 = vsel %vm308, %v340, 0.0
      %v345 = vsel %vm309, %v341, 0.0
      %v346 = vsel %vm310, %v342, 0.0
      %v347 = vsel %vm311, %v343, 0.0
      %v348 = vadd.f32 %v344, %v345
      %v349 = vadd.f32 %v348, %v346
      %v350 = vadd.f32 %v349, %v347
      %351 = vadd.xlane.f32.xlu0 %v350
      %v352 = vpop.xlane.xlu0 %351
      %v353 = vrot.slane %v352, 4
      %v354 = vadd.f32 %v352, %v353
      %v355 = vrot.slane %v354, 2
      %v356 = vadd.f32 %v354, %v355
      %v357 = vrot.slane %v356, 1
      %v358 = vadd.f32 %v356, %v357
      %s359 = vtos %v358
      %v360 = vstv %s359
      %v361 = vmul.f32 %v360, 0.5
      %vm362 = vcmask 0
      %363 = vst.msk [vmem:[%s191] sm:$0x1] %vm362, %v361
      %v364 = vmul.f32 %v317, 24.0
      %v365 = vmul.f32 %v319, 24.0
      %v366 = vmul.f32 %v321, 24.0
      %v367 = vmul.f32 %v323, 24.0
      %v368 = vmul.f32 %v332, 2.0
      %v369 = vmul.f32 %v333, 2.0
      %v370 = vmul.f32 %v334, 2.0
      %v371 = vmul.f32 %v335, 2.0
      %v372 = vsub.f32 %v368, %v328
      %v373 = vsub.f32 %v369, %v329
      %v374 = vsub.f32 %v370, %v330
      %v375 = vsub.f32 %v371, %v331
      %v376 = vmul.f32 %v364, %v372
      %v377 = vmul.f32 %v365, %v373
      %v378 = vmul.f32 %v366, %v374
      %v379 = vmul.f32 %v367, %v375
      %v380 = vsel %vm308, %v376, 0.0
      %v381 = vsel %vm309, %v377, 0.0
      %v382 = vsel %vm310, %v378, 0.0
      %v383 = vsel %vm311, %v379, 0.0
      %384 = vadd.xlane.f32.xlu0 %v380
      %v385 = vpop.xlane.xlu0 %384
      %386 = vadd.xlane.f32.xlu0 %v381
      %v387 = vpop.xlane.xlu0 %386
      %388 = vadd.xlane.f32.xlu0 %v382
      %v389 = vpop.xlane.xlu0 %388
      %390 = vadd.xlane.f32.xlu0 %v383
      %v391 = vpop.xlane.xlu0 %390
      %v392 = vmul.f32 %v385, %v197
      %v393 = vmul.f32 %v387, %v198
      %v394 = vmul.f32 %v389, %v199
      %v395 = vmul.f32 %v391, %v200
      %v396 = vld [vmem:[%s184] sm:$0xff]
      %v397 = vld [vmem:[%s184 + $0x8] sm:$0xff]
      %v398 = vld [vmem:[%s184 + $0x10] sm:$0xff]
      %v399 = vld [vmem:[%s184 + $0x18] sm:$0xff]
      %v400 = vld [vmem:[%s184 + $0x20] sm:$0xff]
      %v401 = vld [vmem:[%s184 + $0x28] sm:$0xff]
      %v402 = vld [vmem:[%s184 + $0x30] sm:$0xff]
      %v403 = vld [vmem:[%s184 + $0x38] sm:$0xff]
      %v404 = vld [vmem:[%s184 + $0x40] sm:$0xff]
      %v405 = vld [vmem:[%s184 + $0x48] sm:$0xff]
      %v406 = vld [vmem:[%s184 + $0x50] sm:$0xff]
      %v407 = vld [vmem:[%s184 + $0x58] sm:$0xff]
      %v408 = vld [vmem:[%s184 + $0x60] sm:$0xff]
      %v409 = vld [vmem:[%s184 + $0x68] sm:$0xff]
      %v410 = vld [vmem:[%s184 + $0x70] sm:$0xff]
      %v411 = vld [vmem:[%s184 + $0x78] sm:$0xff]
      %412 = vmatprep.subr.mxu0 0.0
      %413 = vmatpush1.msra.mxu0 %v411
      %414 = vmatprep.subr.mxu0 0.0
      %415 = vmatpush1.msra.mxu0 %v410
      %416 = vmatprep.subr.mxu0 0.0
      %417 = vmatpush1.msra.mxu0 %v409
      %418 = vmatprep.subr.mxu0 0.0
      %419 = vmatpush1.msra.mxu0 %v408
      %420 = vmatprep.subr.mxu0 0.0
      %421 = vmatpush1.msra.mxu0 %v407
      %422 = vmatprep.subr.mxu0 0.0
      %423 = vmatpush1.msra.mxu0 %v406
      %424 = vmatprep.subr.mxu0 0.0
      %425 = vmatpush1.msra.mxu0 %v405
      %426 = vmatprep.subr.mxu0 0.0
      %427 = vmatpush1.msra.mxu0 %v404
      %428 = vmatprep.subr.mxu0 0.0
      %429 = vmatpush1.msra.mxu0 %v403
      %430 = vmatprep.subr.mxu0 0.0
      %431 = vmatpush1.msra.mxu0 %v402
      %432 = vmatprep.subr.mxu0 0.0
      %433 = vmatpush1.msra.mxu0 %v401
      %434 = vmatprep.subr.mxu0 0.0
      %435 = vmatpush1.msra.mxu0 %v400
      %436 = vmatprep.subr.mxu0 0.0
      %437 = vmatpush1.msra.mxu0 %v399
      %438 = vmatprep.subr.mxu0 0.0
      %439 = vmatpush1.msra.mxu0 %v398
      %440 = vmatprep.subr.mxu0 0.0
      %441 = vmatpush1.msra.mxu0 %v397
      %442 = vmatprep.subr.mxu0 0.0
      %443 = vmatpush1.msra.mxu0 %v396
      %444 = vmatprep.subr.mxu0 0.0
      %445 = vmatpush2.msra.mxu0 0.0
      %446 = vmatprep.subr.mxu0 0.0
      %447 = vmatpush2.msra.mxu0 0.0
      %448 = vmatprep.subr.mxu0 0.0
      %449 = vmatpush2.msra.mxu0 0.0
      %450 = vmatprep.subr.mxu0 0.0
      %451 = vmatpush2.msra.mxu0 0.0
      %452 = vmatprep.subr.mxu0 0.0
      %453 = vmatpush2.msra.mxu0 0.0
      %454 = vmatprep.subr.mxu0 0.0
      %455 = vmatpush2.msra.mxu0 0.0
      %456 = vmatprep.subr.mxu0 0.0
      %457 = vmatpush2.msra.mxu0 0.0
      %458 = vmatprep.subr.mxu0 0.0
      %459 = vmatpush2.msra.mxu0 0.0
      %460 = vmatprep.subr.mxu0 0.0
      %461 = vmatpush2.msra.mxu0 0.0
      %462 = vmatprep.subr.mxu0 0.0
      %463 = vmatpush2.msra.mxu0 0.0
      %464 = vmatprep.subr.mxu0 0.0
      %465 = vmatpush2.msra.mxu0 0.0
      %466 = vmatprep.subr.mxu0 0.0
      %467 = vmatpush2.msra.mxu0 0.0
      %468 = vmatprep.subr.mxu0 0.0
      %469 = vmatpush2.msra.mxu0 0.0
      %470 = vmatprep.subr.mxu0 0.0
      %471 = vmatpush2.msra.mxu0 0.0
      %472 = vmatprep.subr.mxu0 0.0
      %473 = vmatpush2.msra.mxu0 0.0
      %474 = vmatprep.subr.mxu0 0.0
      %475 = vmatpush2.msra.mxu0 0.0
      %476 = vmatprep.mubr.f32.mxu0 0.0
      %477 = vmatmul.mubr.f32.gmra.mxu0 %v380
      %v478 = vpop.f32.mrf.mxu0
      %v479 = vadd.f32 0.0, %v478
      %v480 = vpop.f32.mrf.mxu0
      %481 = vmatprep.mubr.f32.mxu0 0.0
      %482 = vmatmul.mubr.f32.gmra.mxu0 %v381
      %v483 = vpop.f32.mrf.mxu0
      %v484 = vadd.f32 0.0, %v483
      %v485 = vpop.f32.mrf.mxu0
      %486 = vmatprep.mubr.f32.mxu0 0.0
      %487 = vmatmul.mubr.f32.gmra.mxu0 %v382
      %v488 = vpop.f32.mrf.mxu0
      %v489 = vadd.f32 0.0, %v488
      %v490 = vpop.f32.mrf.mxu0
      %491 = vmatprep.mubr.f32.mxu0 0.0
      %492 = vmatmul.mubr.f32.gmra.mxu0 %v383
      %v493 = vpop.f32.mrf.mxu0
      %v494 = vadd.f32 0.0, %v493
      %v495 = vpop.f32.mrf.mxu0
      %496 = vdwg.mxu0
      %v497 = vsub.f32 %v392, %v479
      %v498 = vsub.f32 %v393, %v484
      %v499 = vsub.f32 %v394, %v489
      %v500 = vsub.f32 %v395, %v494
      %vm501 = vcmask 23552
      %502 = vst.msk [vmem:[%s196] sm:$0xff] %vm501, %v497
      %503 = vst.msk [vmem:[%s196 + $0x8] sm:$0xff] %vm501, %v498
      %504 = vst.msk [vmem:[%s196 + $0x10] sm:$0xff] %vm501, %v499
      %505 = vst.msk [vmem:[%s196 + $0x18] sm:$0xff] %vm501, %v500
      %p506 = scmp.lt.s32.totalorder %s15, 1
      %s507 = scalar_select %p506, %s15, 1
      %s508 = scalar_lea.vmem %s2, %s507
      %p509 = scmp.lt.s32.totalorder %s15, 1
      %s510 = scalar_select %p509, %s15, 1
      %s511 = smul.addr %s510, 4
      %s512 = smul.addr %s511, 8
      %s513 = scalar_lea.vmem %s3, %s512
      // Predicated region
      $region29: #{tpu_custom_call.1} parent=27 // pred_check
        %p514 = pneg %p85
      $region30: #{tpu_custom_call.1} parent=27 // pred_check_branch
        %516 = sbr.rel (%p514) target = $region32
      $region31: #{tpu_custom_call.1} parent=27 // pred_region
        _
      $region32: #{tpu_custom_call.1} parent=27 // pred_fallthru
        _
      // Predicated region
      $region33: #{tpu_custom_call.1} parent=27 // pred_check
        %p517 = pneg %p111
      $region34: #{tpu_custom_call.1} parent=27 // pred_check_branch
        %519 = sbr.rel (%p517) target = $region36
      $region35: #{tpu_custom_call.1} parent=27 // pred_region
        _
      $region36: #{tpu_custom_call.1} parent=27 // pred_fallthru
        _
    $region28: #{tpu_custom_call.1} parent=5 // pred_fallthru
      _
    %p520 = scmp.le.s32.totalorder 2, %s10
    // Predicated region
    $region37: #{tpu_custom_call.1} parent=5 // pred_check
      %p521 = pneg %p520
    $region38: #{tpu_custom_call.1} parent=5 // pred_check_branch
      %523 = sbr.rel (%p521) target = $region40
    $region39: #{tpu_custom_call.1} parent=5 // pred_region
      %s524 = ssub.s32 %s10, 2
      // Predicated region
      $region41: #{tpu_custom_call.1} parent=39 // pred_check
        %p525 = pneg %p91
      $region42: #{tpu_custom_call.1} parent=39 // pred_check_branch
        %527 = sbr.rel (%p525) target = $region44
      $region43: #{tpu_custom_call.1} parent=39 // pred_region
        %p528 = scmp.lt.s32.totalorder %s16, 1
        %s529 = scalar_select %p528, %s16, 1
        %s530 = scalar_lea.vmem %s2, %s529
      $region44: #{tpu_custom_call.1} parent=39 // pred_fallthru
        _
      // Predicated region
      $region45: #{tpu_custom_call.1} parent=39 // pred_check
        %p531 = pneg %p117
      $region46: #{tpu_custom_call.1} parent=39 // pred_check_branch
        %533 = sbr.rel (%p531) target = $region48
      $region47: #{tpu_custom_call.1} parent=39 // pred_region
        %p534 = scmp.lt.s32.totalorder %s16, 1
        %s535 = scalar_select %p534, %s16, 1
        %s536 = smul.addr %s535, 4
        %s537 = smul.addr %s536, 8
        %s538 = scalar_lea.vmem %s3, %s537
      $region48: #{tpu_custom_call.1} parent=39 // pred_fallthru
        _
    $region40: #{tpu_custom_call.1} parent=5 // pred_fallthru
      _
  $region6: #{tpu_custom_call.1} parent=0 // loop_footer
    %s14 = sadd.s32 1, %s10
  $region7: #{tpu_custom_call.1} parent=0 // loop_footer_branch
    %9 = sbr.rel target = $region3
  $region8: #{tpu_custom_call.1} parent=0 // loop_exit
    _

</llo_original>
